<compile_context>
chip_gen: v7x
topology: tpu7x:2x2x1
jax: 0.10.0
libtpu: 0.0.40
codegen_flags: <defaults>
</compile_context>

<pallas_src>
import numpy as np
import jax
import jax.numpy as jnp
from jax.experimental import pallas as pl
from jax.experimental.pallas import tpu as pltpu

NEG_SLOPE = 0.2
BN_EPS = 1e-5


# --------------------------------------------------------------------------- #
# static network plan (mirrors SegmentationNet.forward, eval mode)
# --------------------------------------------------------------------------- #
def _make_plan(config):
    plan, channels = [], []
    cin, level = 3, 0
    for cout in config["downsampling_channels"]:
        for _ in range(config["channel_multiplier"]):
            plan.append(("conv", level, True))        # conv + BN + leaky ReLU
            channels.append((cin, cout))
            cin = cout
        plan.append(("pool", level, None))            # MaxPool2d(2,2); Dropout = id (eval)
        level += 1
    for cout in config["upsampling_channels"]:
        plan.append(("up", level, None))              # nn.Upsample(2, 'nearest')
        level -= 1
        plan.append(("conv", level, True))
        channels.append((cin, cout))
        cin = cout
    for cout in config["final_channels"]:
        plan.append(("conv", level, True))
        channels.append((cin, cout))
        cin = cout
    plan.append(("conv", level, False))               # output conv: no BN, no activation
    channels.append((cin, config["num_classes"]))
    n_levels = len(config["downsampling_channels"]) + 1
    return tuple(plan), tuple(channels), n_levels


# --------------------------------------------------------------------------- #
# deterministic parameter construction (eval-mode BN folded into conv)
# --------------------------------------------------------------------------- #
def _init_conv_bn(key, cin, cout):
    k = jax.random.split(key, 6)
    # w[t] == Conv2d.weight[:, :, kh, kw] with t = kh*2 + kw, laid out (t, Cout, Cin)
    w = 0.1 * jax.random.normal(k[0], (4, cout, cin), jnp.float32)
    b = 0.1 * jax.random.normal(k[1], (cout,), jnp.float32)
    gamma = 1.0 + 0.1 * jax.random.normal(k[2], (cout,), jnp.float32)
    beta = 0.1 * jax.random.normal(k[3], (cout,), jnp.float32)
    rmean = 0.1 * jax.random.normal(k[4], (cout,), jnp.float32)
    rvar = jax.random.uniform(k[5], (cout,), jnp.float32, 0.5, 1.5)
    scale = gamma / jnp.sqrt(rvar + BN_EPS)           # fold BN scale into weights
    return {"w": w * scale[None, :, None], "shift": (b - rmean) * scale + beta}


def _init_conv_only(key, cin, cout):
    k = jax.random.split(key, 2)
    w = 0.1 * jax.random.normal(k[0], (4, cout, cin), jnp.float32)
    b = 0.1 * jax.random.normal(k[1], (cout,), jnp.float32)
    return {"w": w, "shift": b}


def init_segnet_params(key, config):
    plan, channels, _ = _make_plan(config)
    flags = [act for kind, _, act in plan if kind == "conv"]
    params = []
    for (cin, cout), has_bn in zip(channels, flags):
        key, sub = jax.random.split(key)
        params.append(_init_conv_bn(sub, cin, cout) if has_bn
                      else _init_conv_only(sub, cin, cout))
    return params


# --------------------------------------------------------------------------- #
# fused kernel
# --------------------------------------------------------------------------- #
_ROLL_FORWARD = None


def _probe_roll_direction():
    """One-time probe of pltpu.roll direction (True == np.roll semantics:
    positive shift moves data toward higher lane indices)."""
    global _ROLL_FORWARD
    if _ROLL_FORWARD is None:
        def k(x_ref, o_ref):
            o_ref[...] = pltpu.roll(x_ref[...], 1, axis=1)
        x = jnp.arange(8 * 128, dtype=jnp.float32).reshape(8, 128)
        y = pl.pallas_call(k, out_shape=jax.ShapeDtypeStruct((8, 128), jnp.float32))(x)
        _ROLL_FORWARD = bool(y[0, 1] == x[0, 0])
    return _ROLL_FORWARD


def _build_kernel(plan, n_levels, wp, neg_slope, roll_forward):
    """Whole-network kernel on a VMEM-resident activation slab.

    Activation layout: (C_PAD, MP_PAD) f32.  Lanes = flattened (n, h, w) over the
    (H+1, W+1) bottom/right-padded grid (plus a zero tail); sublanes = channels.
    A pyramid level-l tensor occupies the stride-2^l sub-grid; every other lane
    (padding row/col, holes, tail) is kept at exactly 0 by the per-level masks,
    which is precisely the zero padding the 2x2 'same' convolution needs.
    """

    def read_ahead(x, d):
        # out[:, i] = x[:, i + d]  (only consumed where i + d is a valid lane)
        m = x.shape[-1]
        return pltpu.roll(x, (m - d) if roll_forward else d, axis=1)

    def spread(x, d):
        # out[:, i] = x[:, i - d]  (wrapped-in lanes come from the zero tail)
        m = x.shape[-1]
        return pltpu.roll(x, d if roll_forward else (m - d), axis=1)

    def kernel(*refs):
        x_ref = refs[0]
        mask_refs = refs[1:1 + n_levels]
        w_refs = refs[1 + n_levels:-1]
        out_ref = refs[-1]

        x = x_ref[...]                               # (C_PAD, MP_PAD), stays in VMEM
        wi = 0
        for kind, level, act in plan:
            s = 1 << level                           # lane stride of this level
            offs = (s, s * wp, s * (wp + 1))         # taps (0,1), (1,0), (1,1)
            if kind == "conv":                       # Conv2d(k=2,'same') [+ BN + leaky ReLU]
                w_ref, b_ref = w_refs[wi], w_refs[wi + 1]
                wi += 2
                acc = jnp.dot(w_ref[0], x, preferred_element_type=jnp.float32)
                for t, d in enumerate(offs):
                    acc = acc + jnp.dot(w_ref[t + 1], read_ahead(x, d),
                                        preferred_element_type=jnp.float32)
                y = acc + b_ref[...]                 # BN scale folded into w; shift here
                if act:
                    y = jnp.maximum(y, neg_slope * y)      # leaky_relu, slope in (0,1)
                x = y * mask_refs[level][...]        # re-zero pads / holes / tail
            elif kind == "pool":                     # MaxPool2d(2,2) (Dropout = identity)
                m = x
                for d in offs:
                    m = jnp.maximum(m, read_ahead(x, d))
                x = m * mask_refs[level + 1][...]
            else:                                    # nearest-neighbour 2x upsample
                st = 1 << (level - 1)
                y = x
                for d in (st, st * wp, st * (wp + 1)):
                    y = y + spread(x, d)             # smear each value into its 2x2 block
                x = y * mask_refs[level - 1][...]
        out_ref[...] = x

    return kernel


def _level_mask(n, h, w, hp, wp, mp_pad, stride):
    m = np.zeros((n, hp, wp), np.float32)
    m[:, 0:h:stride, 0:w:stride] = 1.0
    out = np.zeros((1, mp_pad), np.float32)
    out[0, :n * hp * wp] = m.reshape(-1)
    return jnp.asarray(out)


def make_segnet_forward(config, x_shape):
    n, c_in, h, w = x_shape
    assert c_in == 3, "SegmentationNet hard-codes 3 input channels"
    plan, channels, n_levels = _make_plan(config)
    n_pools = len(config["downsampling_channels"])
    n_ups = len(config["upsampling_channels"])
    assert h % (1 << n_pools) == 0 and w % (1 << n_pools) == 0, (h, w)
    assert n_ups <= n_pools

    hp, wp = h + 1, w + 1                            # PyTorch 'same' for k=2: pad bottom/right
    mp = n * hp * wp
    # Zero-lane tail margin: the largest backward ("spread") displacement used by
    # any upsample, so wrapped lanes are guaranteed to read zeros.
    margin = max([(1 << (lvl - 1)) * (wp + 1) for kind, lvl, _ in plan if kind == "up"] + [0])
    mp_pad = ((mp + margin + 127) // 128) * 128      # lane-dense: multiple of 128 lanes
    c_pad = max([c_in, config["num_classes"]] + [c for pair in channels for c in pair])
    c_pad = ((c_pad + 7) // 8) * 8                   # full sublane tiles for all layers

    # Per-level occupancy masks (1 on the stride-2^l grid of real pixels, 0 elsewhere).
    masks = [_level_mask(n, h, w, hp, wp, mp_pad, 1 << lvl) for lvl in range(n_levels)]

    roll_forward = _probe_roll_direction()
    kernel = _build_kernel(plan, n_levels, wp, NEG_SLOPE, roll_forward)
    n_inputs = 1 + n_levels + 2 * len(channels)

    fused_call = pl.pallas_call(
        kernel,
        out_shape=jax.ShapeDtypeStruct((c_pad, mp_pad), jnp.float32),
        in_specs=[pl.BlockSpec(memory_space=pltpu.MemorySpace.VMEM)] * n_inputs,
        out_specs=pl.BlockSpec(memory_space=pltpu.MemorySpace.VMEM),
    )

    final_level = n_pools - n_ups                    # output resolution = H / 2^final_level
    s_out = 1 << final_level

    def fwd(params, x_nchw):
        # NCHW -> lane-dense padded flat grid (C_PAD, MP_PAD); pads/holes/tail are zero.
        xg = jnp.transpose(x_nchw.astype(jnp.float32), (1, 0, 2, 3))        # (C, N, H, W)
        xg = jnp.pad(xg, ((0, c_pad - c_in), (0, 0), (0, 1), (0, 1)))
        xg = xg.reshape(c_pad, mp)
        xg = jnp.pad(xg, ((0, 0), (0, mp_pad - mp)))

        flat = [xg] + list(masks)
        for p in params:                              # zero-pad weights to uniform C_PAD
            wgt, sft = p["w"], p["shift"]
            _, cout, cin = wgt.shape
            w_pad = jnp.zeros((4, c_pad, c_pad), jnp.float32).at[:, :cout, :cin].set(wgt)
            s_pad = jnp.zeros((c_pad, 1), jnp.float32).at[:cout, 0].set(sft)
            flat += [w_pad, s_pad]

        out = fused_call(*flat)                       # single fused kernel launch

        ncls = config["num_classes"]
        y = out[:ncls, :mp].reshape(ncls, n, hp, wp)[:, :, 0:h:s_out, 0:w:s_out]
        return jnp.transpose(y, (1, 0, 2, 3))         # back to NCHW

    return jax.jit(fwd)


# --------------------------------------------------------------------------- #
# pure-JAX (XLA) reference of the same eval-mode forward, for cross-checking
# --------------------------------------------------------------------------- #
def reference_forward(config, params, x_nchw):
    plan, _, _ = _make_plan(config)
    x = x_nchw.astype(jnp.float32)
    wi = 0
    for kind, _, act in plan:
        if kind == "conv":
            p = params[wi]
            wi += 1
            n_, c_, h_, w_ = x.shape
            xp = jnp.pad(x, ((0, 0), (0, 0), (0, 1), (0, 1)))   # 'same' for k=2
            taps = [xp[:, :, kh:kh + h_, kw:kw + w_] for kh in (0, 1) for kw in (0, 1)]
            y = sum(jnp.einsum("oc,nchw->nohw", p["w"][t], taps[t]) for t in range(4))
            y = y + p["shift"][None, :, None, None]
            if act:
                y = jnp.maximum(y, NEG_SLOPE * y)
            x = y
        elif kind == "pool":
            n_, c_, h_, w_ = x.shape
            x = jnp.max(x.reshape(n_, c_, h_ // 2, 2, w_ // 2, 2), axis=(3, 5))
        else:
            x = jnp.repeat(jnp.repeat(x, 2, axis=2), 2, axis=3)
    return x


if __name__ == "__main__":
    config = dict(
        downsampling_channels=[4, 8],
        upsampling_channels=[8, 4],
        final_channels=[4],
        num_classes=3,
        channel_multiplier=2,
    )
    key = jax.random.PRNGKey(0)
    pkey, xkey = jax.random.split(key)
    params = init_segnet_params(pkey, config)

    # PyTorch NCHW convention: (batch=2, channels=3, H=16, W=16)
    x = jax.random.normal(xkey, (2, 3, 16, 16), jnp.float32)

    forward = make_segnet_forward(config, x.shape)
    y = jax.block_until_ready(forward(params, x))

    assert y.shape == (2, config["num_classes"], 16, 16), y.shape
    assert bool(jnp.all(jnp.isfinite(y)))

    # cross-check the fused Pallas kernel against the pure-JAX reference
    y_ref = jax.block_until_ready(reference_forward(config, params, x))
    rel_err = float(jnp.linalg.norm(y - y_ref) / (jnp.linalg.norm(y_ref) + 1e-12))
    assert rel_err < 5e-2, f"Pallas vs reference relative L2 error too large: {rel_err}"
    print("KERNEL_OK")
</pallas_src>

<mosaic_0001>
module attributes {stable_mosaic.version = 11 : i64} {
  func.func @k(%arg0: memref<8x128xf32, #tpu.memory_space<vmem>>, %arg1: memref<8x128xf32, #tpu.memory_space<vmem>>) attributes {dimension_semantics = [], scalar_prefetch = 0 : i64, scratch_operands = 0 : i64, tpu.core_type = #tpu.core_type<tc>} {
    %c0 = arith.constant 0 : index
    %c0_0 = arith.constant 0 : index
    %0 = vector.load %arg0[%c0, %c0_0] : memref<8x128xf32, #tpu.memory_space<vmem>>, vector<8x128xf32>
    %c1_i32 = arith.constant 1 : i32
    %1 = tpu.dynamic_rotate %0 by %c1_i32 dim 1 : vector<8x128xf32>, i32 -> vector<8x128xf32>
    %c0_1 = arith.constant 0 : index
    %c0_2 = arith.constant 0 : index
    %2 = vector.load %arg1[%c0_1, %c0_2] : memref<8x128xf32, #tpu.memory_space<vmem>>, vector<8x128xf32>
    tpu.vector_store %arg1[%c0_1, %c0_2], %1 {strides = array<i32>} : memref<8x128xf32, #tpu.memory_space<vmem>>, vector<8x128xf32>,
    return
  }
}

</mosaic_0001>

<llo_original>
// kernel: tpu_custom_call.1
$region0: #{tpu_custom_call.1}
  #allocation0 [shape = 'u32[]', space=smem, size = 0x4, offset = 0x4, fixed_abs, tag = 'smem constant byte address 0x4 - core index']
  #allocation1 [shape = 'u32[144,128]{1,0:T(1,128)}', space=vmem, size = 0x12000, scoped, tag = 'internal scratch']
  %s0 = inlined_call_operand.hbm [shape: f32[8,128], index: 0, kind: input, shape index: {}]
  %s1 = inlined_call_operand.hbm [shape: f32[8,128], index: 1, kind: output, shape index: {}]
  %s2 = sld [smem:[#allocation0]]
  $region18: #{tpu_custom_call.1} parent=0
    _
  %s4 = ssub.s32 1, %s2
  %s5 = scalar_select 0, %s4, %s2
  $region1: #{tpu_custom_call.1} parent=0
    #allocation2 [shape = 'u8[4096]{0}', space=vmem, size = 0x1000, scoped, tag = 'input window, operand 0, single buffered']
    #allocation3 [shape = 's32[1]{0}', space=sflag, size = 0x4, scoped, tag = 'scoped memory for tpu_custom_call.1']
    #allocation4 [shape = 's32[1]{0}', space=sflag, size = 0x4, scoped, tag = 'scoped memory for tpu_custom_call.1']
    #allocation5 [shape = 'u8[4096]{0}', space=vmem, size = 0x1000, scoped, tag = 'output window, operand 0, single buffered']
    %6 = vsyncpa [#allocation3], 0
    %7 = vsyncpa [#allocation4], 0
    // Predicated region
    $region2: #{tpu_custom_call.1} parent=1 // pred_check
      _
    $region3: #{tpu_custom_call.1} parent=1 // pred_check_branch
      %9 = sbr.rel (0) target = $region5
    $region4: #{tpu_custom_call.1} parent=1 // pred_region
      %s11 = ssub.s32 128, 128
      %12 = vsyncadd [#allocation3], %s11
      %s14 = sshll.u32 [#allocation2], 4
      %s15 = int_to_ptr.vmem [resolvable:$true] %s14
      %17 = dma.hbm_to_vmem [thread:$0]  %s0, 128, %s15, [#allocation3]
    $region5: #{tpu_custom_call.1} parent=1 // pred_fallthru
      _
    // Predicated region
    $region6: #{tpu_custom_call.1} parent=1 // pred_check
      _
    $region7: #{tpu_custom_call.1} parent=1 // pred_check_branch
      %19 = sbr.rel (0) target = $region9
    $region8: #{tpu_custom_call.1} parent=1 // pred_region
      %20 = dma.done [#allocation3], 128
    $region9: #{tpu_custom_call.1} parent=1 // pred_fallthru
      _
    %v21 = vld [vmem:[#allocation2] sm:$0xff]
    %22 = vrot.lane.b32.xlu0 %v21, 1
    %v23 = vpop.permute.xlu0 %22
    %24 = vst [vmem:[#allocation5] sm:$0xff] %v23
    // Predicated region
    $region10: #{tpu_custom_call.1} parent=1 // pred_check
      _
    $region11: #{tpu_custom_call.1} parent=1 // pred_check_branch
      %26 = sbr.rel (0) target = $region13
    $region12: #{tpu_custom_call.1} parent=1 // pred_region
      %s28 = ssub.s32 128, 128
      %29 = vsyncadd [#allocation4], %s28
      %s31 = sshll.u32 [#allocation5], 4
      %s32 = int_to_ptr.vmem [resolvable:$true] %s31
      %34 = dma.vmem_to_hbm [thread:$0]  %s32, 128, %s1, [#allocation4]
    $region13: #{tpu_custom_call.1} parent=1 // pred_fallthru
      _
    // Predicated region
    $region14: #{tpu_custom_call.1} parent=1 // pred_check
      _
    $region15: #{tpu_custom_call.1} parent=1 // pred_check_branch
      %36 = sbr.rel (0) target = $region17
    $region16: #{tpu_custom_call.1} parent=1 // pred_region
      %37 = dma.done [#allocation4], 128
    $region17: #{tpu_custom_call.1} parent=1 // pred_fallthru
      _
    %38 = vsyncpa [#allocation3], 1
    %39 = vsyncpa [#allocation4], 1

</llo_original>
